<compile_context>
chip_gen: v7x
topology: tpu7x:2x2x1
jax: 0.10.0
libtpu: 0.0.40
codegen_flags: <defaults>
</compile_context>

<pallas_src>
import functools

import jax
import jax.numpy as jnp
from jax import lax
from jax.experimental import pallas as pl
from jax.experimental.pallas import tpu as pltpu


def _distill_kernel(*refs, tn, n_valid, inv_t_const):
    """Partial of sum_{rows in tile} sum_c softmax(t/T) * log_softmax(s/T)."""
    if inv_t_const is None:
        inv_t_ref, out_ref, tgt_ref, partial_ref = refs
        inv_t = inv_t_ref[0]
    else:
        out_ref, tgt_ref, partial_ref = refs
        inv_t = jnp.float32(inv_t_const)

    i = pl.program_id(0)

    s = out_ref[...].astype(jnp.float32)       # raw student logits (TN, C)
    t = tgt_ref[...].astype(jnp.float32)       # raw teacher logits (TN, C)

    # max() commutes with the positive 1/T scale -> take maxes on the raw
    # logits and fold 1/T into the exp() argument: no scaled (TN, C) copies.
    s_max = jnp.max(s, axis=1, keepdims=True)                              # (TN,1)
    t_max = jnp.max(t, axis=1, keepdims=True)                              # (TN,1)

    s_lse = jnp.log(jnp.sum(jnp.exp((s - s_max) * inv_t),
                            axis=1, keepdims=True))                        # (TN,1)
    t_exp = jnp.exp((t - t_max) * inv_t)                                   # (TN,C)
    t_sum = jnp.sum(t_exp, axis=1, keepdims=True)                          # (TN,1)
    ts_dot = jnp.sum(t_exp * s, axis=1, keepdims=True) * inv_t             # (TN,1)

    # sum_c p_t * log_p_s = ts_dot / t_sum - s_max/T - s_lse   (sum_c p_t == 1)
    # Exact per-row division: (TN,1) only, essentially free.
    row = ts_dot / t_sum - s_max * inv_t - s_lse                           # (TN,1)

    # Zero rows of the ragged last block (grid = cdiv(N, TN)); out-of-bounds
    # rows hold garbage, masked with a select so NaN/Inf never propagates.
    row_idx = i * tn + lax.broadcasted_iota(jnp.int32, (tn, 1), 0)
    row = jnp.where(row_idx < n_valid, row, 0.0)
    total = jnp.sum(row)

    # Lane-dense (8, 128) partial block: scalar at [0, 0], zeros elsewhere.
    r = lax.broadcasted_iota(jnp.int32, (8, 128), 0)
    c = lax.broadcasted_iota(jnp.int32, (8, 128), 1)
    partial_ref[...] = jnp.where((r == 0) & (c == 0), total, 0.0)


def _vmem_budget():
    """(vmem_limit_bytes, row-tile byte budget) sized for this TPU generation."""
    try:
        cap = int(pltpu.get_tpu_info().vmem_capacity_bytes)
    except Exception:                       # no device info: assume smallest (v7x)
        cap = 64 * 1024 * 1024
    limit = min(int(cap * 0.85), 110 * 1024 * 1024)  # ~109 MiB v5e/v6e, ~54 MiB v7x
    budget = int(limit * 0.70)                       # inputs (2x dbl-buf) + f32 temps
    return limit, budget


def _choose_row_tile(n, c, itemsize, budget):
    # Per row: 2 inputs x 2 pipeline buffers at input dtype, plus ~3 live f32
    # (TN, C) temporaries (exp(s), exp(t), and the t_exp*s product feeding sum).
    per_row = 2 * 2 * c * itemsize + 3 * c * 4
    tn = max(8, (budget // per_row) // 8 * 8)
    tn = int(min(tn, 1024))                 # diminishing returns past ~1024 rows
    if tn >= n:
        return n                            # single full-extent block (always legal)
    return tn                               # multiple of 8; last block may be ragged


def distillation_loss(output, old_target, temperature, frac, *, row_tile=None):
    """Pallas implementation of DistillationLoss.forward."""
    assert output.shape == old_target.shape and output.ndim == 2
    n, c = output.shape
    itemsize = jnp.dtype(output.dtype).itemsize

    vmem_limit, budget = _vmem_budget()
    tn = row_tile if row_tile is not None else _choose_row_tile(n, c, itemsize, budget)
    grid_n = pl.cdiv(n, tn)

    static_t = isinstance(temperature, (int, float))
    if static_t:
        kernel = functools.partial(_distill_kernel, tn=tn, n_valid=n,
                                   inv_t_const=1.0 / float(temperature))
        in_specs = [
            pl.BlockSpec((tn, c), lambda i: (i, 0)),   # student logits
            pl.BlockSpec((tn, c), lambda i: (i, 0)),   # teacher logits
        ]
        operands = (output, old_target)
    else:
        kernel = functools.partial(_distill_kernel, tn=tn, n_valid=n,
                                   inv_t_const=None)
        in_specs = [
            pl.BlockSpec(memory_space=pltpu.MemorySpace.SMEM),  # 1/T scalar
            pl.BlockSpec((tn, c), lambda i: (i, 0)),            # student logits
            pl.BlockSpec((tn, c), lambda i: (i, 0)),            # teacher logits
        ]
        inv_t = (1.0 / jnp.asarray(temperature, jnp.float32)).reshape(1)
        operands = (inv_t, output, old_target)

    cost = pl.CostEstimate(
        flops=8 * n * c,
        transcendentals=2 * n * c + 2 * n,
        bytes_accessed=2 * n * c * itemsize + grid_n * 8 * 128 * 4,
    )

    partials = pl.pallas_call(
        kernel,
        out_shape=jax.ShapeDtypeStruct((grid_n * 8, 128), jnp.float32),
        grid_spec=pltpu.PrefetchScalarGridSpec(
            num_scalar_prefetch=0,
            grid=(grid_n,),
            in_specs=in_specs,
            out_specs=pl.BlockSpec((8, 128), lambda i: (i, 0)),
        ),
        compiler_params=pltpu.CompilerParams(
            dimension_semantics=("parallel",),     # shard row tiles across TCs
            vmem_limit_bytes=vmem_limit,
        ),
        cost_estimate=cost,
    )(*operands)

    total = jnp.sum(partials)
    alpha = jnp.asarray(frac, jnp.float32)
    return (-total / n) * alpha


if __name__ == "__main__":
    key = jax.random.PRNGKey(0)
    k1, k2 = jax.random.split(key)

    N, C = 8, 32                      # small demo: batch of 8, 32 classes
    output = jax.random.normal(k1, (N, C), dtype=jnp.float32)
    old_target = jax.random.normal(k2, (N, C), dtype=jnp.float32)
    temperature = 2.0
    frac = 0.5

    def ref_loss(out, tgt, T, a):
        out = out.astype(jnp.float32)
        tgt = tgt.astype(jnp.float32)
        return (-jnp.sum(jax.nn.softmax(tgt / T, axis=1)
                         * jax.nn.log_softmax(out / T, axis=1))
                / out.shape[0]) * a

    # 1) f32 inputs, Python-float temperature (baked-constant path).
    loss = distillation_loss(output, old_target, temperature, frac)
    jax.block_until_ready(loss)
    assert jnp.allclose(loss, ref_loss(output, old_target, temperature, frac),
                        rtol=1e-4, atol=1e-5), loss

    # 2) Traced temperature (SMEM-scalar path).
    loss_t = distillation_loss(output, old_target, jnp.float32(temperature), frac)
    jax.block_until_ready(loss_t)
    assert jnp.allclose(loss_t, ref_loss(output, old_target, temperature, frac),
                        rtol=1e-4, atol=1e-5), loss_t

    # 3) bf16 logits (half the DMA bytes) + ragged last row-block:
    #    N=20 with row_tile=8 -> grid of 3, 4-row tail masked by n_valid.
    N2 = 20
    out_bf = jax.random.normal(k1, (N2, C), dtype=jnp.float32).astype(jnp.bfloat16)
    tgt_bf = jax.random.normal(k2, (N2, C), dtype=jnp.float32).astype(jnp.bfloat16)
    loss_bf = distillation_loss(out_bf, tgt_bf, temperature, frac, row_tile=8)
    jax.block_until_ready(loss_bf)
    assert jnp.allclose(loss_bf, ref_loss(out_bf, tgt_bf, temperature, frac),
                        rtol=1e-3, atol=1e-4), loss_bf

    print("KERNEL_OK")
</pallas_src>

<mosaic_0001>
module attributes {stable_mosaic.version = 11 : i64} {
  func.func @_distill_kernel(%arg0: i32, %arg1: memref<8x32xf32, #tpu.memory_space<vmem>>, %arg2: memref<8x32xf32, #tpu.memory_space<vmem>>, %arg3: memref<8x128xf32, #tpu.memory_space<vmem>>) attributes {dimension_semantics = [#tpu.dimension_semantics<parallel>], iteration_bounds = array<i64: 1>, scalar_prefetch = 0 : i64, scratch_operands = 0 : i64, tpu.core_type = #tpu.core_type<tc>, window_params = [{transform_indices = @transform_0, window_bounds = array<i64: 8, 32>}, {transform_indices = @transform_1, window_bounds = array<i64: 8, 32>}, {transform_indices = @transform_2, window_bounds = array<i64: 8, 128>}]} {
    %c0 = arith.constant 0 : index
    %c0_0 = arith.constant 0 : index
    %0 = vector.load %arg1[%c0, %c0_0] : memref<8x32xf32, #tpu.memory_space<vmem>>, vector<8x32xf32>
    %c0_1 = arith.constant 0 : index
    %c0_2 = arith.constant 0 : index
    %1 = vector.load %arg2[%c0_1, %c0_2] : memref<8x32xf32, #tpu.memory_space<vmem>>, vector<8x32xf32>
    %cst = arith.constant dense<0xFF800000> : vector<8xf32>
    %2 = vector.multi_reduction <maximumf>, %0, %cst [1] : vector<8x32xf32> to vector<8xf32>
    %3 = vector.shape_cast %2 : vector<8xf32> to vector<8x1xf32>
    %cst_3 = arith.constant dense<0xFF800000> : vector<8xf32>
    %4 = vector.multi_reduction <maximumf>, %1, %cst_3 [1] : vector<8x32xf32> to vector<8xf32>
    %5 = vector.shape_cast %4 : vector<8xf32> to vector<8x1xf32>
    %6 = vector.broadcast %3 : vector<8x1xf32> to vector<8x32xf32>
    %7 = arith.subf %0, %6 : vector<8x32xf32>
    %cst_4 = arith.constant 5.000000e-01 : f32
    %8 = vector.broadcast %cst_4 : f32 to vector<8x32xf32>
    %9 = arith.mulf %7, %8 : vector<8x32xf32>
    %10 = math.exp %9 : vector<8x32xf32>
    %cst_5 = arith.constant dense<0.000000e+00> : vector<8xf32>
    %11 = vector.multi_reduction <add>, %10, %cst_5 [1] : vector<8x32xf32> to vector<8xf32>
    %12 = vector.shape_cast %11 : vector<8xf32> to vector<8x1xf32>
    %13 = math.log %12 : vector<8x1xf32>
    %14 = vector.broadcast %5 : vector<8x1xf32> to vector<8x32xf32>
    %15 = arith.subf %1, %14 : vector<8x32xf32>
    %cst_6 = arith.constant 5.000000e-01 : f32
    %16 = vector.broadcast %cst_6 : f32 to vector<8x32xf32>
    %17 = arith.mulf %15, %16 : vector<8x32xf32>
    %18 = math.exp %17 : vector<8x32xf32>
    %cst_7 = arith.constant dense<0.000000e+00> : vector<8xf32>
    %19 = vector.multi_reduction <add>, %18, %cst_7 [1] : vector<8x32xf32> to vector<8xf32>
    %20 = vector.shape_cast %19 : vector<8xf32> to vector<8x1xf32>
    %21 = arith.mulf %18, %0 : vector<8x32xf32>
    %cst_8 = arith.constant dense<0.000000e+00> : vector<8xf32>
    %22 = vector.multi_reduction <add>, %21, %cst_8 [1] : vector<8x32xf32> to vector<8xf32>
    %23 = vector.shape_cast %22 : vector<8xf32> to vector<8x1xf32>
    %cst_9 = arith.constant 5.000000e-01 : f32
    %24 = vector.broadcast %cst_9 : f32 to vector<8x1xf32>
    %25 = arith.mulf %23, %24 : vector<8x1xf32>
    %26 = arith.divf %25, %20 : vector<8x1xf32>
    %cst_10 = arith.constant 5.000000e-01 : f32
    %27 = vector.broadcast %cst_10 : f32 to vector<8x1xf32>
    %28 = arith.mulf %3, %27 : vector<8x1xf32>
    %29 = arith.subf %26, %28 : vector<8x1xf32>
    %30 = arith.subf %29, %13 : vector<8x1xf32>
    %c8_i32 = arith.constant 8 : i32
    %31 = arith.muli %arg0, %c8_i32 : i32
    %32 = tpu.iota {dimensions = array<i32: 0>} : vector<8x1xi32>
    %33 = vector.broadcast %31 : i32 to vector<8x1xi32>
    %34 = arith.addi %33, %32 : vector<8x1xi32>
    %c8_i32_11 = arith.constant 8 : i32
    %35 = vector.broadcast %c8_i32_11 : i32 to vector<8x1xi32>
    %36 = arith.cmpi slt, %34, %35 : vector<8x1xi32>
    %cst_12 = arith.constant 0.000000e+00 : f32
    %37 = vector.broadcast %cst_12 : f32 to vector<8x1xf32>
    %38 = arith.select %36, %30, %37 : vector<8x1xi1>, vector<8x1xf32>
    %39 = vector.shape_cast %38 : vector<8x1xf32> to vector<1x8x1xf32>
    %cst_13 = arith.constant dense<0.000000e+00> : vector<1xf32>
    %40 = vector.multi_reduction <add>, %39, %cst_13 [1, 2] : vector<1x8x1xf32> to vector<1xf32>
    %41 = vector.shape_cast %40 : vector<1xf32> to vector<1x1x1xf32>
    %42 = vector.extract %41[0, 0, 0] : f32 from vector<1x1x1xf32>
    %43 = tpu.iota {dimensions = array<i32: 0>} : vector<8x128xi32>
    %44 = tpu.iota {dimensions = array<i32: 1>} : vector<8x128xi32>
    %c0_i32 = arith.constant 0 : i32
    %45 = vector.broadcast %c0_i32 : i32 to vector<8x128xi32>
    %46 = arith.cmpi eq, %43, %45 : vector<8x128xi32>
    %c0_i32_14 = arith.constant 0 : i32
    %47 = vector.broadcast %c0_i32_14 : i32 to vector<8x128xi32>
    %48 = arith.cmpi eq, %44, %47 : vector<8x128xi32>
    %49 = arith.andi %46, %48 : vector<8x128xi1>
    %cst_15 = arith.constant 0.000000e+00 : f32
    %50 = vector.broadcast %42 : f32 to vector<8x128xf32>
    %51 = vector.broadcast %cst_15 : f32 to vector<8x128xf32>
    %52 = arith.select %49, %50, %51 : vector<8x128xi1>, vector<8x128xf32>
    %c0_16 = arith.constant 0 : index
    %c0_17 = arith.constant 0 : index
    %53 = vector.load %arg3[%c0_16, %c0_17] : memref<8x128xf32, #tpu.memory_space<vmem>>, vector<8x128xf32>
    tpu.vector_store %arg3[%c0_16, %c0_17], %52 {strides = array<i32>} : memref<8x128xf32, #tpu.memory_space<vmem>>, vector<8x128xf32>,
    return
  }
  func.func @transform_0(%arg0: i32) -> (i32, i32) {
    %c0_i32 = arith.constant 0 : i32
    %c0_i32_0 = arith.constant 0 : i32
    return %arg0, %c0_i32 : i32, i32
  }
  func.func @transform_1(%arg0: i32) -> (i32, i32) {
    %c0_i32 = arith.constant 0 : i32
    %c0_i32_0 = arith.constant 0 : i32
    return %arg0, %c0_i32 : i32, i32
  }
  func.func @transform_2(%arg0: i32) -> (i32, i32) {
    %c0_i32 = arith.constant 0 : i32
    %c0_i32_0 = arith.constant 0 : i32
    return %arg0, %c0_i32 : i32, i32
  }
}

</mosaic_0001>

<llo_original>
// kernel: tpu_custom_call.1
$region0: #{tpu_custom_call.1}
  #allocation0 [shape = 'u32[]', space=smem, size = 0x4, offset = 0x4, fixed_abs, tag = 'smem constant byte address 0x4 - core index']
  #allocation1 [shape = 'u32[144,128]{1,0:T(1,128)}', space=vmem, size = 0x12000, scoped, tag = 'internal scratch']
  %s0 = inlined_call_operand.hbm [shape: f32[8,32], index: 0, kind: input, shape index: {}]
  %s1 = inlined_call_operand.hbm [shape: f32[8,32], index: 1, kind: input, shape index: {}]
  %s2 = inlined_call_operand.hbm [shape: f32[8,128], index: 2, kind: output, shape index: {}]
  %s3 = sld [smem:[#allocation0]]
  $region26: #{tpu_custom_call.1} parent=0
    _
  %s5 = ssub.s32 1, %s3
  %s6 = scalar_select 0, %s5, %s3
  $region1: #{tpu_custom_call.1} parent=0
    #allocation2 [shape = 'u8[4096]{0}', space=vmem, size = 0x1000, scoped, tag = 'input window, operand 0, single buffered']
    #allocation3 [shape = 's32[1]{0}', space=sflag, size = 0x4, scoped, tag = 'scoped memory for tpu_custom_call.1']
    #allocation4 [shape = 's32[1]{0}', space=sflag, size = 0x4, scoped, tag = 'scoped memory for tpu_custom_call.1']
    #allocation5 [shape = 'u8[4096]{0}', space=vmem, size = 0x1000, scoped, tag = 'input window, operand 1, single buffered']
    #allocation6 [shape = 's32[1]{0}', space=sflag, size = 0x4, scoped, tag = 'scoped memory for tpu_custom_call.1']
    #allocation7 [shape = 'u8[4096]{0}', space=vmem, size = 0x1000, scoped, tag = 'output window, operand 0, single buffered']
    %7 = vsyncpa [#allocation3], 0
    %8 = vsyncpa [#allocation6], 0
    %9 = vsyncpa [#allocation4], 0
    // Predicated region
    $region2: #{tpu_custom_call.1} parent=1 // pred_check
      _
    $region3: #{tpu_custom_call.1} parent=1 // pred_check_branch
      %11 = sbr.rel (0) target = $region5
    $region4: #{tpu_custom_call.1} parent=1 // pred_region
      %s13 = ssub.s32 128, 128
      %14 = vsyncadd [#allocation3], %s13
      %s16 = sshll.u32 [#allocation2], 4
      %s17 = int_to_ptr.vmem [resolvable:$true] %s16
      %19 = dma.hbm_to_vmem [thread:$0]  %s0, 128, %s17, [#allocation3]
    $region5: #{tpu_custom_call.1} parent=1 // pred_fallthru
      _
    // Predicated region
    $region6: #{tpu_custom_call.1} parent=1 // pred_check
      _
    $region7: #{tpu_custom_call.1} parent=1 // pred_check_branch
      %21 = sbr.rel (0) target = $region9
    $region8: #{tpu_custom_call.1} parent=1 // pred_region
      %s23 = ssub.s32 128, 128
      %24 = vsyncadd [#allocation6], %s23
      %s26 = sshll.u32 [#allocation5], 4
      %s27 = int_to_ptr.vmem [resolvable:$true] %s26
      %29 = dma.hbm_to_vmem [thread:$0]  %s1, 128, %s27, [#allocation6]
    $region9: #{tpu_custom_call.1} parent=1 // pred_fallthru
      _
    // Predicated region
    $region10: #{tpu_custom_call.1} parent=1 // pred_check
      _
    $region11: #{tpu_custom_call.1} parent=1 // pred_check_branch
      %31 = sbr.rel (0) target = $region13
    $region12: #{tpu_custom_call.1} parent=1 // pred_region
      %32 = dma.done [#allocation3], 128
    $region13: #{tpu_custom_call.1} parent=1 // pred_fallthru
      _
    // Predicated region
    $region14: #{tpu_custom_call.1} parent=1 // pred_check
      _
    $region15: #{tpu_custom_call.1} parent=1 // pred_check_branch
      %34 = sbr.rel (0) target = $region17
    $region16: #{tpu_custom_call.1} parent=1 // pred_region
      %35 = dma.done [#allocation6], 128
    $region17: #{tpu_custom_call.1} parent=1 // pred_fallthru
      _
    %v36 = vld [vmem:[#allocation2] sm:$0xff]
    %v37 = vld [vmem:[#allocation5] sm:$0xff]
    %vm38 = vcmask 261120
    %v39 = vsel %vm38, %v36, -inf
    %40 = vmax.xlane.f32.xlu0 %v39
    %v41 = vpop.xlane.xlu0 %40
    %v42 = vsel %vm38, %v37, -inf
    %43 = vmax.xlane.f32.xlu0 %v42
    %v44 = vpop.xlane.xlu0 %43
    %v45 = vsub.f32 %v36, %v41
    %v46 = vmul.f32 %v45, 0.5
    %v47 = vmul.f32 %v46, 1.442695
    %v48 = vpow.pop %v47
    %v49 = vsel %vm38, %v48, 0.0
    %50 = vadd.xlane.f32.xlu0 %v49
    %v51 = vpop.xlane.xlu0 %50
    %v52 = vlog2.pop %v51
    %v53 = vmul.f32 %v52, 0.6931472
    %v54 = vsub.f32 %v37, %v44
    %v55 = vmul.f32 %v54, 0.5
    %v56 = vmul.f32 %v55, 1.442695
    %v57 = vpow.pop %v56
    %v58 = vsel %vm38, %v57, 0.0
    %59 = vadd.xlane.f32.xlu0 %v58
    %v60 = vpop.xlane.xlu0 %59
    %v61 = vmul.f32 %v57, %v36
    %v62 = vsel %vm38, %v61, 0.0
    %63 = vadd.xlane.f32.xlu0 %v62
    %v64 = vpop.xlane.xlu0 %63
    %v65 = vmul.f32 %v64, 0.5
    %v66 = vrcp.pop %v60
    %v67 = vmul.f32 %v65, %v66
    %v68 = vmul.f32 %v41, 0.5
    %v69 = vsub.f32 %v67, %v68
    %v70 = vsub.f32 %v69, %v53
    %s71 = smul.u32 0, 8
    %v72 = vlaneseq
    %v73 = vshrl.u32 %v72, 7
    %v74 = vstv %s71
    %v75 = vadd.s32 %v74, %v73
    %vm76 = vcmp.lt.s32.totalorder %v75, 8
    %v77 = vsel %vm76, %v70, 0.0
    %vm78 = vcmask 7168
    %v79 = vsel %vm78, %v77, 0.0
    %80 = vadd.xlane.f32.xlu0 %v79
    %v81 = vpop.xlane.xlu0 %80
    %v82 = vrot.slane %v81, 4
    %v83 = vadd.f32 %v81, %v82
    %v84 = vrot.slane %v83, 2
    %v85 = vadd.f32 %v83, %v84
    %v86 = vrot.slane %v85, 1
    %v87 = vadd.f32 %v85, %v86
    %s88 = vtos %v87
    %v89 = vlaneseq
    %v90 = vand.u32 %v89, 127
    %vm91 = vcmp.eq.s32.totalorder %v73, 0
    %vm92 = vcmp.eq.s32.totalorder %v90, 0
    %vm93 = vmand %vm91, %vm92
    %v94 = vstv %s88
    %v95 = vsel %vm93, %v94, 0.0
    %96 = vst [vmem:[#allocation7] sm:$0xff] %v95
    // Predicated region
    $region18: #{tpu_custom_call.1} parent=1 // pred_check
      _
    $region19: #{tpu_custom_call.1} parent=1 // pred_check_branch
      %98 = sbr.rel (0) target = $region21
    $region20: #{tpu_custom_call.1} parent=1 // pred_region
      %s100 = ssub.s32 128, 128
      %101 = vsyncadd [#allocation4], %s100
      %s103 = sshll.u32 [#allocation7], 4
      %s104 = int_to_ptr.vmem [resolvable:$true] %s103
      %106 = dma.vmem_to_hbm [thread:$0]  %s104, 128, %s2, [#allocation4]
    $region21: #{tpu_custom_call.1} parent=1 // pred_fallthru
      _
    // Predicated region
    $region22: #{tpu_custom_call.1} parent=1 // pred_check
      _
    $region23: #{tpu_custom_call.1} parent=1 // pred_check_branch
      %108 = sbr.rel (0) target = $region25
    $region24: #{tpu_custom_call.1} parent=1 // pred_region
      %109 = dma.done [#allocation4], 128
    $region25: #{tpu_custom_call.1} parent=1 // pred_fallthru
      _
    %110 = vsyncpa [#allocation3], 1
    %111 = vsyncpa [#allocation6], 1
    %112 = vsyncpa [#allocation4], 1

</llo_original>
